<compile_context>
chip_gen: v7x
topology: tpu7x:2x2x1
jax: 0.10.0
libtpu: 0.0.40
codegen_flags: <defaults>
</compile_context>

<pallas_src>
import functools

import jax
import jax.numpy as jnp
from jax import lax
from jax.experimental import pallas as pl
from jax.experimental.pallas import tpu as pltpu


def _pinn_kernel(x_ref, *refs, layer_modes, chunk, matmul_dtype):
    """Full MLP chain on one batch tile; batch lives on the lane axis.

    x_ref: (input_dim, batch_tile)
    refs = (w0, b0, w1, b1, ..., w_{L-1}, b_{L-1}, out_ref)
      mode 'k1' : w is (out, 1)              -> VPU broadcast outer product
      mode 'm1' : w is (in, 1) (pre-transposed) -> VPU multiply + XLU sublane sum
      mode 'mxu': w is (out, in)             -> MXU matmul
      b_l: (out_l, 1)
    Hidden layers use tanh; the final layer is linear (matches nn.Sequential).
    """
    num_layers = len(layer_modes)
    out_ref = refs[-1]
    param_refs = refs[:-1]

    # Hoist the (tiny, loop-invariant) parameter loads out of the chunk loop.
    params = []
    for l in range(num_layers):
        w = param_refs[2 * l][...].astype(jnp.float32)
        b = param_refs[2 * l + 1][...].astype(jnp.float32)
        params.append((w, b))

    batch_tile = x_ref.shape[1]
    num_chunks = batch_tile // chunk

    def chunk_body(c, carry):
        off = pl.multiple_of(c * chunk, chunk)
        h = x_ref[:, pl.ds(off, chunk)].astype(jnp.float32)      # (in, C)
        for l, (mode, (w, b)) in enumerate(zip(layer_modes, params)):
            if mode == "k1":
                # K == 1: outer product as a VPU broadcast multiply; avoids a
                # degenerate MXU pass.
                h = w * h + b                                    # (out, C)
            elif mode == "m1":
                # M == 1: weight row pre-transposed to (in, 1); VPU multiply +
                # XLU sublane reduction instead of a 1-row MXU matmul.
                h = jnp.sum(w * h, axis=0, keepdims=True) + b    # (1, C)
            else:
                h = jnp.dot(w.astype(matmul_dtype), h.astype(matmul_dtype),
                            preferred_element_type=jnp.float32) + b
            if l != num_layers - 1:
                h = jnp.tanh(h)                                  # activation_fn
        out_ref[:, pl.ds(off, chunk)] = h.astype(out_ref.dtype)
        return carry

    lax.fori_loop(0, num_chunks, chunk_body, 0, unroll=True)


def _choose_tiling(n, *, tb_max, chunk):
    """Pick (batch_tile, chunk, grid_len).

    batch_tile is a multiple of `chunk` (itself a multiple of 128); the grid
    is kept at an even length >= 2 where possible so ("parallel",) semantics
    can split tiles across both v7x TensorCores.  The final (ragged) batch
    block is masked by the pipeline -- no wrapper-side padding copy.
    """
    n128 = pl.cdiv(n, 128) * 128
    if n128 <= chunk:
        return n128, n128, 1
    g = max(2, pl.cdiv(n128, tb_max))
    if g % 2:
        g += 1
    batch_tile = pl.cdiv(pl.cdiv(n128, g), chunk) * chunk
    grid_len = pl.cdiv(n, batch_tile)
    return batch_tile, chunk, grid_len


def pinn_forward(t, weights, biases, *, tb_max=4096, chunk=512,
                 matmul_dtype=jnp.float32):
    """Run the PINN MLP forward via pallas_call.

    t:       (N, input_dim) float32
    weights: list of (out_dim, in_dim) arrays (PyTorch nn.Linear layout)
    biases:  list of (out_dim,) arrays
    Returns (N, output_dim) float32.

    matmul_dtype=jnp.bfloat16 cuts the MXU pass count ~3x on v6e (f32
    accumulate kept); default stays float32 for bit-tight agreement with the
    PyTorch reference -- these 32-wide matmuls are not the bottleneck.
    """
    n, in_dim = t.shape
    out_dim = weights[-1].shape[0]

    batch_tile, chunk, grid_len = _choose_tiling(n, tb_max=tb_max, chunk=chunk)

    # Batch -> lane axis.  For input_dim == 1 this transpose is a pure reshape
    # (no data movement).  No jnp.pad: the ragged final tile is masked by the
    # pipeline (partial reads/writes are clipped to the array extent).
    t_t = t.T                                                    # (in_dim, N)

    in_specs = [pl.BlockSpec((in_dim, batch_tile), lambda i: (0, i))]
    params_flat = []
    layer_modes = []
    for w, b in zip(weights, biases):
        m, k = w.shape
        if k == 1:
            mode, w_pass = "k1", w                               # (out, 1)
        elif m == 1:
            mode, w_pass = "m1", w.T                             # (in, 1)
        else:
            mode, w_pass = "mxu", w                              # (out, in)
        layer_modes.append(mode)
        b2d = b.reshape(-1, 1)                                   # (out, 1)
        # Full-array blocks with a constant index: the pipeline fetches them
        # once and reuses them across all grid steps.
        in_specs.append(pl.BlockSpec(w_pass.shape, lambda i: (0, 0)))
        in_specs.append(pl.BlockSpec(b2d.shape, lambda i: (0, 0)))
        params_flat.extend([w_pass, b2d])

    # Lane-dense output block: (out_dim, batch_tile).
    out_specs = pl.BlockSpec((out_dim, batch_tile), lambda i: (0, i))

    kernel = functools.partial(_pinn_kernel, layer_modes=tuple(layer_modes),
                               chunk=chunk, matmul_dtype=matmul_dtype)
    out_t = pl.pallas_call(
        kernel,
        out_shape=jax.ShapeDtypeStruct((out_dim, n), jnp.float32),
        grid_spec=pltpu.PrefetchScalarGridSpec(
            num_scalar_prefetch=0,
            grid=(grid_len,),
            in_specs=in_specs,
            out_specs=out_specs,
        ),
        compiler_params=pltpu.CompilerParams(
            dimension_semantics=("parallel",)),   # batch tiles shard across TCs
    )(t_t, *params_flat)

    # (out_dim, N) -> (N, out_dim); for output_dim == 1 this is a free reshape.
    return out_t.T


def xavier_uniform(key, fan_in, fan_out, dtype=jnp.float32):
    """torch.nn.init.xavier_uniform_ (gain=1) for a (fan_out, fan_in) weight."""
    limit = (6.0 / (fan_in + fan_out)) ** 0.5
    return jax.random.uniform(key, (fan_out, fan_in), dtype,
                              minval=-limit, maxval=limit)


def init_pinn_params(key, input_dim, hidden_dims, output_dim):
    dims = [input_dim] + list(hidden_dims) + [output_dim]
    weights, biases = [], []
    for i in range(len(dims) - 1):
        key, sub = jax.random.split(key)
        weights.append(xavier_uniform(sub, dims[i], dims[i + 1]))      # (out, in)
        biases.append(jnp.zeros((dims[i + 1],), jnp.float32))          # constant_(bias, 0)
    return weights, biases


def pinn_reference(t, weights, biases):
    """Plain-JAX reference mirroring the PyTorch nn.Sequential (x @ W.T + b)."""
    h = t
    n_layers = len(weights)
    for i, (w, b) in enumerate(zip(weights, biases)):
        h = h @ w.T + b
        if i != n_layers - 1:
            h = jnp.tanh(h)
    return h


if __name__ == "__main__":
    # Shapes implied by the module: t is (batch, input_dim); a small PINN MLP.
    input_dim = 1
    hidden_dims = (32, 32)
    output_dim = 1
    batch = 1000   # non-multiple of the tile -> exercises the ragged-tile masking path

    key = jax.random.PRNGKey(0)
    key, pkey, tkey = jax.random.split(key, 3)
    weights, biases = init_pinn_params(pkey, input_dim, hidden_dims, output_dim)
    t = jax.random.uniform(tkey, (batch, input_dim), jnp.float32)

    out = pinn_forward(t, weights, biases)
    out = jax.block_until_ready(out)

    ref = pinn_reference(t, weights, biases)
    assert out.shape == (batch, output_dim)
    assert jnp.allclose(out, ref, atol=1e-3, rtol=1e-3), "mismatch vs reference"

    print("KERNEL_OK")
</pallas_src>

<mosaic_0001>
module attributes {stable_mosaic.version = 11 : i64} {
  func.func @_pinn_kernel(%arg0: i32, %arg1: memref<1x512xf32, #tpu.memory_space<vmem>>, %arg2: memref<32x1xf32, #tpu.memory_space<vmem>>, %arg3: memref<32x1xf32, #tpu.memory_space<vmem>>, %arg4: memref<32x32xf32, #tpu.memory_space<vmem>>, %arg5: memref<32x1xf32, #tpu.memory_space<vmem>>, %arg6: memref<32x1xf32, #tpu.memory_space<vmem>>, %arg7: memref<1x1xf32, #tpu.memory_space<vmem>>, %arg8: memref<1x512xf32, #tpu.memory_space<vmem>>) attributes {dimension_semantics = [#tpu.dimension_semantics<parallel>], iteration_bounds = array<i64: 2>, scalar_prefetch = 0 : i64, scratch_operands = 0 : i64, tpu.core_type = #tpu.core_type<tc>, window_params = [{transform_indices = @transform_0, window_bounds = array<i64: 1, 512>}, {pipeline_mode = #tpu.pipeline_mode<synchronous>, transform_indices = @transform_1, window_bounds = array<i64: 32, 1>}, {pipeline_mode = #tpu.pipeline_mode<synchronous>, transform_indices = @transform_2, window_bounds = array<i64: 32, 1>}, {pipeline_mode = #tpu.pipeline_mode<synchronous>, transform_indices = @transform_3, window_bounds = array<i64: 32, 32>}, {pipeline_mode = #tpu.pipeline_mode<synchronous>, transform_indices = @transform_4, window_bounds = array<i64: 32, 1>}, {pipeline_mode = #tpu.pipeline_mode<synchronous>, transform_indices = @transform_5, window_bounds = array<i64: 32, 1>}, {pipeline_mode = #tpu.pipeline_mode<synchronous>, transform_indices = @transform_6, window_bounds = array<i64: 1, 1>}, {transform_indices = @transform_7, window_bounds = array<i64: 1, 512>}]} {
    %c0 = arith.constant 0 : index
    %c0_0 = arith.constant 0 : index
    %0 = vector.load %arg2[%c0, %c0_0] : memref<32x1xf32, #tpu.memory_space<vmem>>, vector<32x1xf32>
    %c0_1 = arith.constant 0 : index
    %c0_2 = arith.constant 0 : index
    %1 = vector.load %arg3[%c0_1, %c0_2] : memref<32x1xf32, #tpu.memory_space<vmem>>, vector<32x1xf32>
    %c0_3 = arith.constant 0 : index
    %c0_4 = arith.constant 0 : index
    %2 = vector.load %arg4[%c0_3, %c0_4] : memref<32x32xf32, #tpu.memory_space<vmem>>, vector<32x32xf32>
    %c0_5 = arith.constant 0 : index
    %c0_6 = arith.constant 0 : index
    %3 = vector.load %arg5[%c0_5, %c0_6] : memref<32x1xf32, #tpu.memory_space<vmem>>, vector<32x1xf32>
    %c0_7 = arith.constant 0 : index
    %c0_8 = arith.constant 0 : index
    %4 = vector.load %arg6[%c0_7, %c0_8] : memref<32x1xf32, #tpu.memory_space<vmem>>, vector<32x1xf32>
    %c0_9 = arith.constant 0 : index
    %c0_10 = arith.constant 0 : index
    %5 = vector.load %arg7[%c0_9, %c0_10] : memref<1x1xf32, #tpu.memory_space<vmem>>, vector<1x1xf32>
    %c0_i32 = arith.constant 0 : i32
    %c512_i32 = arith.constant 512 : i32
    %6 = arith.muli %c0_i32, %c512_i32 : i32
    %7 = tpu.assume_multiple %6, 512 : i32
    %c0_11 = arith.constant 0 : index
    %8 = arith.index_cast %7 : i32 to index
    %9 = vector.load %arg1[%c0_11, %8] : memref<1x512xf32, #tpu.memory_space<vmem>>, vector<1x512xf32>
    %10 = vector.broadcast %0 : vector<32x1xf32> to vector<32x512xf32>
    %11 = vector.broadcast %9 : vector<1x512xf32> to vector<32x512xf32>
    %12 = arith.mulf %10, %11 : vector<32x512xf32>
    %13 = vector.broadcast %1 : vector<32x1xf32> to vector<32x512xf32>
    %14 = arith.addf %12, %13 : vector<32x512xf32>
    %15 = math.tanh %14 : vector<32x512xf32>
    %cst = arith.constant dense<0.000000e+00> : vector<32x512xf32>
    %16 = tpu.matmul %2, %15, %cst {dimension_numbers = #tpu.dot_dimension_numbers<[1], [0], [0], [1], [0, 0, 1, 1], [], []>} : vector<32x32xf32>, vector<32x512xf32>, vector<32x512xf32> -> vector<32x512xf32>
    %17 = vector.broadcast %3 : vector<32x1xf32> to vector<32x512xf32>
    %18 = arith.addf %16, %17 : vector<32x512xf32>
    %19 = math.tanh %18 : vector<32x512xf32>
    %20 = vector.broadcast %4 : vector<32x1xf32> to vector<32x512xf32>
    %21 = arith.mulf %20, %19 : vector<32x512xf32>
    %cst_12 = arith.constant dense<0.000000e+00> : vector<512xf32>
    %22 = vector.multi_reduction <add>, %21, %cst_12 [0] : vector<32x512xf32> to vector<512xf32>
    %23 = vector.shape_cast %22 : vector<512xf32> to vector<1x512xf32>
    %24 = vector.broadcast %5 : vector<1x1xf32> to vector<1x512xf32>
    %25 = arith.addf %23, %24 : vector<1x512xf32>
    %c0_13 = arith.constant 0 : index
    %26 = arith.index_cast %7 : i32 to index
    %27 = vector.load %arg8[%c0_13, %26] : memref<1x512xf32, #tpu.memory_space<vmem>>, vector<1x512xf32>
    tpu.vector_store %arg8[%c0_13, %26], %25 {strides = array<i32>} : memref<1x512xf32, #tpu.memory_space<vmem>>, vector<1x512xf32>,
    %c1_i32 = arith.constant 1 : i32
    return
  }
  func.func @transform_0(%arg0: i32) -> (i32, i32) {
    %c0_i32 = arith.constant 0 : i32
    %c0_i32_0 = arith.constant 0 : i32
    return %c0_i32, %arg0 : i32, i32
  }
  func.func @transform_1(%arg0: i32) -> (i32, i32) {
    %c0_i32 = arith.constant 0 : i32
    %c0_i32_0 = arith.constant 0 : i32
    %c0_i32_1 = arith.constant 0 : i32
    return %c0_i32, %c0_i32_0 : i32, i32
  }
  func.func @transform_2(%arg0: i32) -> (i32, i32) {
    %c0_i32 = arith.constant 0 : i32
    %c0_i32_0 = arith.constant 0 : i32
    %c0_i32_1 = arith.constant 0 : i32
    return %c0_i32, %c0_i32_0 : i32, i32
  }
  func.func @transform_3(%arg0: i32) -> (i32, i32) {
    %c0_i32 = arith.constant 0 : i32
    %c0_i32_0 = arith.constant 0 : i32
    %c0_i32_1 = arith.constant 0 : i32
    return %c0_i32, %c0_i32_0 : i32, i32
  }
  func.func @transform_4(%arg0: i32) -> (i32, i32) {
    %c0_i32 = arith.constant 0 : i32
    %c0_i32_0 = arith.constant 0 : i32
    %c0_i32_1 = arith.constant 0 : i32
    return %c0_i32, %c0_i32_0 : i32, i32
  }
  func.func @transform_5(%arg0: i32) -> (i32, i32) {
    %c0_i32 = arith.constant 0 : i32
    %c0_i32_0 = arith.constant 0 : i32
    %c0_i32_1 = arith.constant 0 : i32
    return %c0_i32, %c0_i32_0 : i32, i32
  }
  func.func @transform_6(%arg0: i32) -> (i32, i32) {
    %c0_i32 = arith.constant 0 : i32
    %c0_i32_0 = arith.constant 0 : i32
    %c0_i32_1 = arith.constant 0 : i32
    return %c0_i32, %c0_i32_0 : i32, i32
  }
  func.func @transform_7(%arg0: i32) -> (i32, i32) {
    %c0_i32 = arith.constant 0 : i32
    %c0_i32_0 = arith.constant 0 : i32
    return %c0_i32, %arg0 : i32, i32
  }
}

</mosaic_0001>

<llo_original>
// kernel: tpu_custom_call.1
$region0: #{tpu_custom_call.1}
  #allocation0 [shape = 'u32[]', space=smem, size = 0x4, offset = 0x4, fixed_abs, tag = 'smem constant byte address 0x4 - core index']
  #allocation1 [shape = 'u32[144,128]{1,0:T(1,128)}', space=vmem, size = 0x12000, scoped, tag = 'internal scratch']
  #allocation2 [shape = 'f32[1,1]{1,0:T(1,128)S(1)}', space=vmem, size = 0x200, scoped, tag = 'scoped memory for tpu_custom_call.1']
  %s0 = inlined_call_operand.vmem [shape: f32[1,1000], index: 0, kind: input, shape index: {}]
  %s1 = inlined_call_operand.vmem [shape: f32[32,1], index: 1, kind: input, shape index: {}]
  %s2 = inlined_call_operand.vmem [shape: f32[32,1], index: 2, kind: input, shape index: {}]
  %s3 = inlined_call_operand.vmem [shape: f32[32,32], index: 3, kind: input, shape index: {}]
  %s4 = inlined_call_operand.vmem [shape: f32[32,1], index: 4, kind: input, shape index: {}]
  %s5 = inlined_call_operand.vmem [shape: f32[32,1], index: 5, kind: input, shape index: {}]
  %s6 = inlined_call_operand.<no memory space> [shape: f32[1,1], index: 6, kind: input, shape index: {}]
  %s7 = inlined_call_operand.hbm [shape: f32[1,1000], index: 7, kind: output, shape index: {}]
  %s8 = sld [smem:[#allocation0]]
  $region61: #{tpu_custom_call.1} parent=0
    _
  %s10 = ssub.s32 1, %s8
  %s11 = scalar_select 0, %s10, %s8
  %v12 = vstv %s6
  %13 = vst [vmem:[#allocation2] sm:$0x1] %v12
  $region1: #{tpu_custom_call.1} parent=0
    #allocation3 [shape = 'u8[4096]{0}', space=vmem, size = 0x1000, scoped, tag = 'output window, operand 0']
    #allocation4 [shape = 's32[2]{0}', space=sflag, size = 0x8, scoped, tag = 'scoped memory for tpu_custom_call.1']
    %14 = vsyncpa [#allocation4], 0
    %s15 = scalar_lea.sflag [#allocation4], 1
    %16 = vsyncpa %s15, 0
    loop: start=0, step=1, limit=4
    $region2: #{tpu_custom_call.1} parent=1 // loop_pre_header
      _
    $region3: #{tpu_custom_call.1} parent=1 // loop_header
      %s18 = sphi 0, %s22
      %p19 = scmp.ge.s32.totalorder %s18, 4
      %s28 = sphi 0, %s30
      %s31 = sphi 0, %s28
      %s32 = sphi 0, %s31
      %s48 = sphi 0, %s32
      %s52 = sphi 0, %s52
      %s54 = sphi 0, %s52
      %s55 = sphi 0, %s54
      %s69 = sphi 0, %s55
      %s73 = sphi 0, %s73
      %s75 = sphi 0, %s73
      %s76 = sphi 0, %s75
      %s90 = sphi 0, %s76
      %s94 = sphi 0, %s94
      %s96 = sphi 0, %s94
      %s97 = sphi 0, %s96
      %s111 = sphi 0, %s97
      %s115 = sphi 0, %s115
      %s117 = sphi 0, %s115
      %s118 = sphi 0, %s117
      %s132 = sphi 0, %s118
      %s136 = sphi 0, %s136
      %s138 = sphi 0, %s136
      %s139 = sphi 0, %s138
      %s153 = sphi 0, %s139
      %s157 = sphi 0, %s157
      %s159 = sphi 0, %s157
      %s160 = sphi 0, %s159
      %s174 = sphi 0, %s160
      %s180 = sphi 0, %s182
      %s183 = sphi 0, %s180
      %s184 = sphi 0, %s183
      %s200 = sphi 0, %s184
    $region4: #{tpu_custom_call.1} parent=1 // loop_header_branch
      %21 = sbr.rel (%p19) target = $region8
    $region5: #{tpu_custom_call.1} parent=1 // loop_body
      %s23 = ssub.s32 %s18, 1
      %s24 = ssub.s32 %s18, 2
      %s25 = sadd.s32 %s18, 1
      %s26 = ssub.s32 %s18, %s25
      %p27 = scmp.eq.s32.totalorder %s26, 0
      %s29 = sadd.s32 %s28, 1
      %s30 = scalar_select %p27, %s28, %s29
      %p33 = pneg %p27
      %p34 = scmp.eq.s32.totalorder %s18, 1
      %p35 = por %p33, %p34
      %p36 = scmp.ne.s32.totalorder %s28, %s31
      %p37 = scmp.eq.s32.totalorder %s18, 0
      %p38 = por %p36, %p37
      %p39 = scmp.ne.s32.totalorder %s28, %s31
      %p40 = scmp.eq.s32.totalorder %s23, 1
      %p41 = por %p39, %p40
      %p42 = scmp.ne.s32.totalorder %s31, %s32
      %p43 = scmp.eq.s32.totalorder %s23, 0
      %p44 = por %p42, %p43
      %p45 = scmp.ne.s32.totalorder %s31, %s32
      %p46 = scmp.eq.s32.totalorder %s24, 1
      %p47 = por %p45, %p46
      %p49 = scmp.ne.s32.totalorder %s32, %s48
      %p50 = scmp.eq.s32.totalorder %s24, 0
      %p51 = por %p49, %p50
      %s53 = sadd.s32 %s52, 1
      %p56 = scmp.eq.s32.totalorder %s18, 1
      %p57 = scmp.ne.s32.totalorder %s52, %s54
      %p58 = scmp.eq.s32.totalorder %s18, 0
      %p59 = por %p57, %p58
      %p60 = scmp.ne.s32.totalorder %s52, %s54
      %p61 = scmp.eq.s32.totalorder %s23, 1
      %p62 = por %p60, %p61
      %p63 = scmp.ne.s32.totalorder %s54, %s55
      %p64 = scmp.eq.s32.totalorder %s23, 0
      %p65 = por %p63, %p64
      %p66 = scmp.ne.s32.totalorder %s54, %s55
      %p67 = scmp.eq.s32.totalorder %s24, 1
      %p68 = por %p66, %p67
      %p70 = scmp.ne.s32.totalorder %s55, %s69
      %p71 = scmp.eq.s32.totalorder %s24, 0
      %p72 = por %p70, %p71
      %s74 = sadd.s32 %s73, 1
      %p77 = scmp.eq.s32.totalorder %s18, 1
      %p78 = scmp.ne.s32.totalorder %s73, %s75
      %p79 = scmp.eq.s32.totalorder %s18, 0
      %p80 = por %p78, %p79
      %p81 = scmp.ne.s32.totalorder %s73, %s75
      %p82 = scmp.eq.s32.totalorder %s23, 1
      %p83 = por %p81, %p82
      %p84 = scmp.ne.s32.totalorder %s75, %s76
      %p85 = scmp.eq.s32.totalorder %s23, 0
      %p86 = por %p84, %p85
      %p87 = scmp.ne.s32.totalorder %s75, %s76
      %p88 = scmp.eq.s32.totalorder %s24, 1
      %p89 = por %p87, %p88
      %p91 = scmp.ne.s32.totalorder %s76, %s90
      %p92 = scmp.eq.s32.totalorder %s24, 0
      %p93 = por %p91, %p92
      %s95 = sadd.s32 %s94, 1
      %p98 = scmp.eq.s32.totalorder %s18, 1
      %p99 = scmp.ne.s32.totalorder %s94, %s96
      %p100 = scmp.eq.s32.totalorder %s18, 0
      %p101 = por %p99, %p100
      %p102 = scmp.ne.s32.totalorder %s94, %s96
      %p103 = scmp.eq.s32.totalorder %s23, 1
      %p104 = por %p102, %p103
      %p105 = scmp.ne.s32.totalorder %s96, %s97
      %p106 = scmp.eq.s32.totalorder %s23, 0
      %p107 = por %p105, %p106
      %p108 = scmp.ne.s32.totalorder %s96, %s97
      %p109 = scmp.eq.s32.totalorder %s24, 1
      %p110 = por %p108, %p109
      %p112 = scmp.ne.s32.totalorder %s97, %s111
      %p113 = scmp.eq.s32.totalorder %s24, 0
      %p114 = por %p112, %p113
      %s116 = sadd.s32 %s115, 1
      %p119 = scmp.eq.s32.totalorder %s18, 1
      %p120 = scmp.ne.s32.totalorder %s115, %s117
      %p121 = scmp.eq.s32.totalorder %s18, 0
      %p122 = por %p120, %p121
      %p123 = scmp.ne.s32.totalorder %s115, %s117
      %p124 = scmp.eq.s32.totalorder %s23, 1
      %p125 = por %p123, %p124
      %p126 = scmp.ne.s32.totalorder %s117, %s118
      %p127 = scmp.eq.s32.totalorder %s23, 0
      %p128 = por %p126, %p127
      %p129 = scmp.ne.s32.totalorder %s117, %s118
      %p130 = scmp.eq.s32.totalorder %s24, 1
      %p131 = por %p129, %p130
      %p133 = scmp.ne.s32.totalorder %s118, %s132
      %p134 = scmp.eq.s32.totalorder %s24, 0
      %p135 = por %p133, %p134
      %s137 = sadd.s32 %s136, 1
      %p140 = scmp.eq.s32.totalorder %s18, 1
      %p141 = scmp.ne.s32.totalorder %s136, %s138
      %p142 = scmp.eq.s32.totalorder %s18, 0
      %p143 = por %p141, %p142
      %p144 = scmp.ne.s32.totalorder %s136, %s138
      %p145 = scmp.eq.s32.totalorder %s23, 1
      %p146 = por %p144, %p145
      %p147 = scmp.ne.s32.totalorder %s138, %s139
      %p148 = scmp.eq.s32.totalorder %s23, 0
      %p149 = por %p147, %p148
      %p150 = scmp.ne.s32.totalorder %s138, %s139
      %p151 = scmp.eq.s32.totalorder %s24, 1
      %p152 = por %p150, %p151
      %p154 = scmp.ne.s32.totalorder %s139, %s153
      %p155 = scmp.eq.s32.totalorder %s24, 0
      %p156 = por %p154, %p155
      %s158 = sadd.s32 %s157, 1
      %p161 = scmp.eq.s32.totalorder %s18, 1
      %p162 = scmp.ne.s32.totalorder %s157, %s159
      %p163 = scmp.eq.s32.totalorder %s18, 0
      %p164 = por %p162, %p163
      %p165 = scmp.ne.s32.totalorder %s157, %s159
      %p166 = scmp.eq.s32.totalorder %s23, 1
      %p167 = por %p165, %p166
      %p168 = scmp.ne.s32.totalorder %s159, %s160
      %p169 = scmp.eq.s32.totalorder %s23, 0
      %p170 = por %p168, %p169
      %p171 = scmp.ne.s32.totalorder %s159, %s160
      %p172 = scmp.eq.s32.totalorder %s24, 1
      %p173 = por %p171, %p172
      %p175 = scmp.ne.s32.totalorder %s160, %s174
      %p176 = scmp.eq.s32.totalorder %s24, 0
      %p177 = por %p175, %p176
      %s178 = ssub.s32 %s18, %s25
      %p179 = scmp.eq.s32.totalorder %s178, 0
      %s181 = sadd.s32 %s180, 1
      %s182 = scalar_select %p179, %s180, %s181
      %p185 = pneg %p179
      %p186 = scmp.eq.s32.totalorder %s18, 1
      %p187 = por %p185, %p186
      %p188 = scmp.ne.s32.totalorder %s180, %s183
      %p189 = scmp.eq.s32.totalorder %s18, 0
      %p190 = por %p188, %p189
      %p191 = scmp.ne.s32.totalorder %s180, %s183
      %p192 = scmp.eq.s32.totalorder %s23, 1
      %p193 = por %p191, %p192
      %p194 = scmp.ne.s32.totalorder %s183, %s184
      %p195 = scmp.eq.s32.totalorder %s23, 0
      %p196 = por %p194, %p195
      %p197 = scmp.ne.s32.totalorder %s183, %s184
      %p198 = scmp.eq.s32.totalorder %s24, 1
      %p199 = por %p197, %p198
      %p201 = scmp.ne.s32.totalorder %s184, %s200
      %p202 = scmp.eq.s32.totalorder %s24, 0
      %p203 = por %p201, %p202
      %p204 = scmp.le.s32.totalorder 1, %s18
      %p205 = scmp.lt.s32.totalorder %s18, 3
      %p206 = pnand %p204, %p205
      %p207 = pneg %p206
      // Predicated region
      $region9: #{tpu_custom_call.1} parent=5 // pred_check
        _
      $region10: #{tpu_custom_call.1} parent=5 // pred_check_branch
        %209 = sbr.rel (%p206) target = $region12
      $region11: #{tpu_custom_call.1} parent=5 // pred_region
        %s210 = ssub.s32 %s18, 1
        // Predicated region
        $region13: #{tpu_custom_call.1} parent=11 // pred_check
          %p211 = pneg %p65
        $region14: #{tpu_custom_call.1} parent=11 // pred_check_branch
          %213 = sbr.rel (%p211) target = $region16
        $region15: #{tpu_custom_call.1} parent=11 // pred_region
          _
        $region16: #{tpu_custom_call.1} parent=11 // pred_fallthru
          _
        // Predicated region
        $region17: #{tpu_custom_call.1} parent=11 // pred_check
          %p214 = pneg %p86
        $region18: #{tpu_custom_call.1} parent=11 // pred_check_branch
          %216 = sbr.rel (%p214) target = $region20
        $region19: #{tpu_custom_call.1} parent=11 // pred_region
          _
        $region20: #{tpu_custom_call.1} parent=11 // pred_fallthru
          _
        // Predicated region
        $region21: #{tpu_custom_call.1} parent=11 // pred_check
          %p217 = pneg %p107
        $region22: #{tpu_custom_call.1} parent=11 // pred_check_branch
          %219 = sbr.rel (%p217) target = $region24
        $region23: #{tpu_custom_call.1} parent=11 // pred_region
          _
        $region24: #{tpu_custom_call.1} parent=11 // pred_fallthru
          _
        // Predicated region
        $region25: #{tpu_custom_call.1} parent=11 // pred_check
          %p220 = pneg %p128
        $region26: #{tpu_custom_call.1} parent=11 // pred_check_branch
          %222 = sbr.rel (%p220) target = $region28
        $region27: #{tpu_custom_call.1} parent=11 // pred_region
          _
        $region28: #{tpu_custom_call.1} parent=11 // pred_fallthru
          _
        // Predicated region
        $region29: #{tpu_custom_call.1} parent=11 // pred_check
          %p223 = pneg %p149
        $region30: #{tpu_custom_call.1} parent=11 // pred_check_branch
          %225 = sbr.rel (%p223) target = $region32
        $region31: #{tpu_custom_call.1} parent=11 // pred_region
          _
        $region32: #{tpu_custom_call.1} parent=11 // pred_fallthru
          _
        // Predicated region
        $region33: #{tpu_custom_call.1} parent=11 // pred_check
          %p226 = pneg %p170
        $region34: #{tpu_custom_call.1} parent=11 // pred_check_branch
          %228 = sbr.rel (%p226) target = $region36
        $region35: #{tpu_custom_call.1} parent=11 // pred_region
          _
        $region36: #{tpu_custom_call.1} parent=11 // pred_fallthru
          _
      $region12: #{tpu_custom_call.1} parent=5 // pred_fallthru
        _
      %p229 = scmp.lt.s32.totalorder %s18, 2
      // Predicated region
      $region37: #{tpu_custom_call.1} parent=5 // pred_check
        %p230 = pneg %p229
      $region38: #{tpu_custom_call.1} parent=5 // pred_check_branch
        %232 = sbr.rel (%p230) target = $region40
      $region39: #{tpu_custom_call.1} parent=5 // pred_region
        // Predicated region
        $region41: #{tpu_custom_call.1} parent=39 // pred_check
          %p233 = pneg %p38
        $region42: #{tpu_custom_call.1} parent=39 // pred_check_branch
          %235 = sbr.rel (%p233) target = $region44
        $region43: #{tpu_custom_call.1} parent=39 // pred_region
          %s236 = smul.u32 4, %s18
          %p237 = scmp.lt.s32.totalorder %s236, 7
          %s238 = scalar_select %p237, %s236, 7
          %s239 = scalar_lea.vmem %s0, %s238
          %s240 = smul.u32 4, %s18
        $region44: #{tpu_custom_call.1} parent=39 // pred_fallthru
          _
      $region40: #{tpu_custom_call.1} parent=5 // pred_fallthru
        _
      %p241 = scmp.le.s32.totalorder 1, %s18
      %p242 = scmp.lt.s32.totalorder %s18, 3
      %p243 = pnand %p241, %p242
      %p244 = pneg %p243
      // Predicated region
      $region45: #{tpu_custom_call.1} parent=5 // pred_check
        _
      $region46: #{tpu_custom_call.1} parent=5 // pred_check_branch
        %246 = sbr.rel (%p243) target = $region48
      $region47: #{tpu_custom_call.1} parent=5 // pred_region
        %s247 = ssub.s32 %s18, 1
        %s248 = smul.u32 4, %s23
        %p249 = scmp.lt.s32.totalorder %s248, 7
        %s250 = scalar_select %p249, %s248, 7
        %s251 = scalar_lea.vmem %s0, %s250
        %p252 = pneg %p44
        %p253 = pneg %p41
        %p254 = pneg %p65
        %p255 = pneg %p62
        %p256 = pneg %p86
        %p257 = pneg %p83
        %p258 = pneg %p107
        %p259 = pneg %p104
        %p260 = pneg %p128
        %p261 = pneg %p125
        %p262 = pneg %p149
        %p263 = pneg %p146
        %p264 = pneg %p170
        %p265 = pneg %p167
        %p266 = pneg %p196
        %p267 = pneg %p193
        %s268 = sand.u32 %s183, 1
        %s269 = scalar_lea.sflag [#allocation4], %s268
        %s270 = sand.u32 %s183, 1
        %s271 = smul.addr %s270, 4
        %s272 = scalar_lea.vmem [#allocation3], %s271
        %s273 = smul.u32 4, %s23
        %p274 = scmp.lt.s32.totalorder %s273, 7
        %s275 = scalar_select %p274, %s273, 7
        %s276 = scalar_lea.vmem %s0, %s275
        %s277 = smul.u32 4, %s23
        %s278 = smul.u32 4, %s23
        %v279 = vld [vmem:[%s1] sm:$0xff]
        %v280 = vld [vmem:[%s1 + $0x8] sm:$0xff]
        %v281 = vld [vmem:[%s1 + $0x10] sm:$0xff]
        %v282 = vld [vmem:[%s1 + $0x18] sm:$0xff]
        %v283 = vld [vmem:[%s2] sm:$0xff]
        %v284 = vld [vmem:[%s2 + $0x8] sm:$0xff]
        %v285 = vld [vmem:[%s2 + $0x10] sm:$0xff]
        %v286 = vld [vmem:[%s2 + $0x18] sm:$0xff]
        %v287 = vld [vmem:[%s3] sm:$0xff]
        %v288 = vld [vmem:[%s3 + $0x8] sm:$0xff]
        %v289 = vld [vmem:[%s3 + $0x10] sm:$0xff]
        %v290 = vld [vmem:[%s3 + $0x18] sm:$0xff]
        %v291 = vld [vmem:[%s4] sm:$0xff]
        %v292 = vld [vmem:[%s4 + $0x8] sm:$0xff]
        %v293 = vld [vmem:[%s4 + $0x10] sm:$0xff]
        %v294 = vld [vmem:[%s4 + $0x18] sm:$0xff]
        %v295 = vld [vmem:[%s5] sm:$0xff]
        %v296 = vld [vmem:[%s5 + $0x8] sm:$0xff]
        %v297 = vld [vmem:[%s5 + $0x10] sm:$0xff]
        %v298 = vld [vmem:[%s5 + $0x18] sm:$0xff]
        %v299 = vld [vmem:[#allocation2] sm:$0x1]
        %v300 = vld [vmem:[%s276] sm:$0xf]
        %302 = vset.pattern.permute.xlu0 0
        %303 = vperm.xlu0 %302, %v279
        %v304 = vpop.permute.xlu0 %303
        %307 = vset.pattern.permute.xlu0 0
        %308 = vperm.xlu0 %307, %v280
        %v309 = vpop.permute.xlu0 %308
        %312 = vset.pattern.permute.xlu0 0
        %313 = vperm.xlu0 %312, %v281
        %v314 = vpop.permute.xlu0 %313
        %317 = vset.pattern.permute.xlu0 0
        %318 = vperm.xlu0 %317, %v282
        %v319 = vpop.permute.xlu0 %318
        %v322 = vlaneseq
        %v323 = vshrl.u32 %v322, 7
        %v324 = vsub.s32 0, %v323
        %v325 = vrot.slane %v300, %v324
        %v326 = vlaneseq
        %v327 = vshrl.u32 %v326, 7
        %v328 = vsub.s32 1, %v327
        %v329 = vrot.slane %v300, %v328
        %v330 = vlaneseq
        %v331 = vshrl.u32 %v330, 7
        %v332 = vsub.s32 2, %v331
        %v333 = vrot.slane %v300, %v332
        %v334 = vlaneseq
        %v335 = vshrl.u32 %v334, 7
        %v336 = vsub.s32 3, %v335
        %v337 = vrot.slane %v300, %v336
        %v342 = vmul.f32 %v304, %v325
        %v343 = vmul.f32 %v304, %v329
        %v344 = vmul.f32 %v304, %v333
        %v345 = vmul.f32 %v304, %v337
        %v346 = vmul.f32 %v309, %v325
        %v347 = vmul.f32 %v309, %v329
        %v348 = vmul.f32 %v309, %v333
        %v349 = vmul.f32 %v309, %v337
        %v350 = vmul.f32 %v314, %v325
        %v351 = vmul.f32 %v314, %v329
        %v352 = vmul.f32 %v314, %v333
        %v353 = vmul.f32 %v314, %v337
        %v354 = vmul.f32 %v319, %v325
        %v355 = vmul.f32 %v319, %v329
        %v356 = vmul.f32 %v319, %v333
        %v357 = vmul.f32 %v319, %v337
        %359 = vset.pattern.permute.xlu0 0
        %360 = vperm.xlu0 %359, %v283
        %v361 = vpop.permute.xlu0 %360
        %364 = vset.pattern.permute.xlu0 0
        %365 = vperm.xlu0 %364, %v284
        %v366 = vpop.permute.xlu0 %365
        %369 = vset.pattern.permute.xlu0 0
        %370 = vperm.xlu0 %369, %v285
        %v371 = vpop.permute.xlu0 %370
        %374 = vset.pattern.permute.xlu0 0
        %375 = vperm.xlu0 %374, %v286
        %v376 = vpop.permute.xlu0 %375
        %v378 = vadd.f32 %v342, %v361
        %v379 = vadd.f32 %v343, %v361
        %v380 = vadd.f32 %v344, %v361
        %v381 = vadd.f32 %v345, %v361
        %v382 = vadd.f32 %v346, %v366
        %v383 = vadd.f32 %v347, %v366
        %v384 = vadd.f32 %v348, %v366
        %v385 = vadd.f32 %v349, %v366
        %v386 = vadd.f32 %v350, %v371
        %v387 = vadd.f32 %v351, %v371
        %v388 = vadd.f32 %v352, %v371
        %v389 = vadd.f32 %v353, %v371
        %v390 = vadd.f32 %v354, %v376
        %v391 = vadd.f32 %v355, %v376
        %v392 = vadd.f32 %v356, %v376
        %v393 = vadd.f32 %v357, %v376
        %v394 = vtanh.pop %v378
        %v395 = vtanh.pop %v379
        %v396 = vtanh.pop %v380
        %v397 = vtanh.pop %v381
        %v398 = vtanh.pop %v382
        %v399 = vtanh.pop %v383
        %v400 = vtanh.pop %v384
        %v401 = vtanh.pop %v385
        %v402 = vtanh.pop %v386
        %v403 = vtanh.pop %v387
        %v404 = vtanh.pop %v388
        %v405 = vtanh.pop %v389
        %v406 = vtanh.pop %v390
        %v407 = vtanh.pop %v391
        %v408 = vtanh.pop %v392
        %v409 = vtanh.pop %v393
        %411 = vset.pattern.permute.xlu0 0
        %412 = vperm.xlu0 %411, %v291
        %v413 = vpop.permute.xlu0 %412
        %416 = vset.pattern.permute.xlu0 0
        %417 = vperm.xlu0 %416, %v292
        %v418 = vpop.permute.xlu0 %417
        %421 = vset.pattern.permute.xlu0 0
        %422 = vperm.xlu0 %421, %v293
        %v423 = vpop.permute.xlu0 %422
        %426 = vset.pattern.permute.xlu0 0
        %427 = vperm.xlu0 %426, %v294
        %v428 = vpop.permute.xlu0 %427
        %vm430 = vcmask 261120
        %v432 = vsel %vm430, %v287, 0
        %v435 = vsel %vm430, %v288, 0
        %v438 = vsel %vm430, %v289, 0
        %v441 = vsel %vm430, %v290, 0
        %443 = vmatprep.subr.mxu0 %v395
        %444 = vmatpush1.msra.mxu0 %v394
        %445 = vmatprep.subr.mxu0 %v399
        %446 = vmatpush1.msra.mxu0 %v398
        %447 = vmatprep.subr.mxu0 %v403
        %448 = vmatpush1.msra.mxu0 %v402
        %449 = vmatprep.subr.mxu0 %v407
        %450 = vmatpush1.msra.mxu0 %v406
        %451 = vmatprep.subr.mxu0 0.0
        %452 = vmatpush1.msra.mxu0 0.0
        %453 = vmatprep.subr.mxu0 0.0
        %454 = vmatpush1.msra.mxu0 0.0
        %455 = vmatprep.subr.mxu0 0.0
        %456 = vmatpush1.msra.mxu0 0.0
        %457 = vmatprep.subr.mxu0 0.0
        %458 = vmatpush1.msra.mxu0 0.0
        %459 = vmatprep.subr.mxu0 0.0
        %460 = vmatpush1.msra.mxu0 0.0
        %461 = vmatprep.subr.mxu0 0.0
        %462 = vmatpush1.msra.mxu0 0.0
        %463 = vmatprep.subr.mxu0 0.0
        %464 = vmatpush1.msra.mxu0 0.0
        %465 = vmatprep.subr.mxu0 0.0
        %466 = vmatpush1.msra.mxu0 0.0
        %467 = vmatprep.subr.mxu0 0.0
        %468 = vmatpush1.msra.mxu0 0.0
        %469 = vmatprep.subr.mxu0 0.0
        %470 = vmatpush1.msra.mxu0 0.0
        %471 = vmatprep.subr.mxu0 0.0
        %472 = vmatpush1.msra.mxu0 0.0
        %473 = vmatprep.subr.mxu0 0.0
        %474 = vmatpush1.msra.mxu0 0.0
        %475 = vmatprep.subr.mxu0 0.0
        %476 = vmatpush1.msra.mxu0 0.0
        %477 = vmatprep.subr.mxu0 0.0
        %478 = vmatpush1.msra.mxu0 0.0
        %479 = vmatprep.subr.mxu0 0.0
        %480 = vmatpush1.msra.mxu0 0.0
        %481 = vmatprep.subr.mxu0 0.0
        %482 = vmatpush1.msra.mxu0 0.0
        %483 = vmatprep.subr.mxu0 0.0
        %484 = vmatpush1.msra.mxu0 0.0
        %485 = vmatprep.subr.mxu0 0.0
        %486 = vmatpush1.msra.mxu0 0.0
        %487 = vmatprep.subr.mxu0 0.0
        %488 = vmatpush1.msra.mxu0 0.0
        %489 = vmatprep.subr.mxu0 0.0
        %490 = vmatpush1.msra.mxu0 0.0
        %491 = vmatprep.subr.mxu0 0.0
        %492 = vmatpush1.msra.mxu0 0.0
        %493 = vmatprep.subr.mxu0 0.0
        %494 = vmatpush1.msra.mxu0 0.0
        %495 = vmatprep.subr.mxu0 0.0
        %496 = vmatpush1.msra.mxu0 0.0
        %497 = vmatprep.subr.mxu0 0.0
        %498 = vmatpush1.msra.mxu0 0.0
        %499 = vmatprep.subr.mxu0 0.0
        %500 = vmatpush1.msra.mxu0 0.0
        %501 = vmatprep.subr.mxu0 0.0
        %502 = vmatpush1.msra.mxu0 0.0
        %503 = vmatprep.subr.mxu0 0.0
        %504 = vmatpush1.msra.mxu0 0.0
        %505 = vmatprep.subr.mxu0 0.0
        %506 = vmatpush1.msra.mxu0 0.0
        %507 = vmatprep.mubr.f32.mxu0 0.0
        %508 = vmatmul.mubr.f32.gmra.mrb[0].mxu0 %v432
        %v509 = vpop.f32.mrb[0].mxu0
        %v510 = vadd.f32 %v413, %v509
        %v511 = vpop.f32.mrb[0].mxu0
        %v512 = vadd.f32 %v413, %v511
        %513 = vmatprep.mubr.f32.mxu0 0.0
        %514 = vmatmul.mubr.f32.gmra.mrb[0].mxu0 %v435
        %v515 = vpop.f32.mrb[0].mxu0
        %v516 = vadd.f32 %v418, %v515
        %v517 = vpop.f32.mrb[0].mxu0
        %v518 = vadd.f32 %v418, %v517
        %519 = vmatprep.mubr.f32.mxu0 0.0
        %520 = vmatmul.mubr.f32.gmra.mrb[0].mxu0 %v438
        %v521 = vpop.f32.mrb[0].mxu0
        %v522 = vadd.f32 %v423, %v521
        %v523 = vpop.f32.mrb[0].mxu0
        %v524 = vadd.f32 %v423, %v523
        %525 = vmatprep.mubr.f32.mxu0 0.0
        %526 = vmatmul.mubr.f32.gmra.mrb[0].mxu0 %v441
        %v527 = vpop.f32.mrb[0].mxu0
        %v528 = vadd.f32 %v428, %v527
        %v529 = vpop.f32.mrb[0].mxu0
        %v530 = vadd.f32 %v428, %v529
        %531 = vdwg.mxu0
        %532 = vmatprep.subr.mxu0 %v397
        %533 = vmatpush1.msra.mxu0 %v396
        %534 = vmatprep.subr.mxu0 %v401
        %535 = vmatpush1.msra.mxu0 %v400
        %536 = vmatprep.subr.mxu0 %v405
        %537 = vmatpush1.msra.mxu0 %v404
        %538 = vmatprep.subr.mxu0 %v409
        %539 = vmatpush1.msra.mxu0 %v408
        %540 = vmatprep.subr.mxu0 0.0
        %541 = vmatpush1.msra.mxu0 0.0
        %542 = vmatprep.subr.mxu0 0.0
        %543 = vmatpush1.msra.mxu0 0.0
        %544 = vmatprep.subr.mxu0 0.0
        %545 = vmatpush1.msra.mxu0 0.0
        %546 = vmatprep.subr.mxu0 0.0
        %547 = vmatpush1.msra.mxu0 0.0
        %548 = vmatprep.subr.mxu0 0.0
        %549 = vmatpush1.msra.mxu0 0.0
        %550 = vmatprep.subr.mxu0 0.0
        %551 = vmatpush1.msra.mxu0 0.0
        %552 = vmatprep.subr.mxu0 0.0
        %553 = vmatpush1.msra.mxu0 0.0
        %554 = vmatprep.subr.mxu0 0.0
        %555 = vmatpush1.msra.mxu0 0.0
        %556 = vmatprep.subr.mxu0 0.0
        %557 = vmatpush1.msra.mxu0 0.0
        %558 = vmatprep.subr.mxu0 0.0
        %559 = vmatpush1.msra.mxu0 0.0
        %560 = vmatprep.subr.mxu0 0.0
        %561 = vmatpush1.msra.mxu0 0.0
        %562 = vmatprep.subr.mxu0 0.0
        %563 = vmatpush1.msra.mxu0 0.0
        %564 = vmatprep.subr.mxu0 0.0
        %565 = vmatpush1.msra.mxu0 0.0
        %566 = vmatprep.subr.mxu0 0.0
        %567 = vmatpush1.msra.mxu0 0.0
        %568 = vmatprep.subr.mxu0 0.0
        %569 = vmatpush1.msra.mxu0 0.0
        %570 = vmatprep.subr.mxu0 0.0
        %571 = vmatpush1.msra.mxu0 0.0
        %572 = vmatprep.subr.mxu0 0.0
        %573 = vmatpush1.msra.mxu0 0.0
        %574 = vmatprep.subr.mxu0 0.0
        %575 = vmatpush1.msra.mxu0 0.0
        %576 = vmatprep.subr.mxu0 0.0
        %577 = vmatpush1.msra.mxu0 0.0
        %578 = vmatprep.subr.mxu0 0.0
        %579 = vmatpush1.msra.mxu0 0.0
        %580 = vmatprep.subr.mxu0 0.0
        %581 = vmatpush1.msra.mxu0 0.0
        %582 = vmatprep.subr.mxu0 0.0
        %583 = vmatpush1.msra.mxu0 0.0
        %584 = vmatprep.subr.mxu0 0.0
        %585 = vmatpush1.msra.mxu0 0.0
        %586 = vmatprep.subr.mxu0 0.0
        %587 = vmatpush1.msra.mxu0 0.0
        %588 = vmatprep.subr.mxu0 0.0
        %589 = vmatpush1.msra.mxu0 0.0
        %590 = vmatprep.subr.mxu0 0.0
        %591 = vmatpush1.msra.mxu0 0.0
        %592 = vmatprep.subr.mxu0 0.0
        %593 = vmatpush1.msra.mxu0 0.0
        %594 = vmatprep.subr.mxu0 0.0
        %595 = vmatpush1.msra.mxu0 0.0
        %596 = vmatprep.mubr.f32.mxu0 0.0
        %597 = vmatmul.mubr.f32.gmra.mrb[0].mxu0 %v432
        %v598 = vpop.f32.mrb[0].mxu0
        %v599 = vadd.f32 %v413, %v598
        %v600 = vpop.f32.mrb[0].mxu0
        %v601 = vadd.f32 %v413, %v600
        %602 = vmatprep.mubr.f32.mxu0 0.0
        %603 = vmatmul.mubr.f32.gmra.mrb[0].mxu0 %v435
        %v604 = vpop.f32.mrb[0].mxu0
        %v605 = vadd.f32 %v418, %v604
        %v606 = vpop.f32.mrb[0].mxu0
        %v607 = vadd.f32 %v418, %v606
        %608 = vmatprep.mubr.f32.mxu0 0.0
        %609 = vmatmul.mubr.f32.gmra.mrb[0].mxu0 %v438
        %v610 = vpop.f32.mrb[0].mxu0
        %v611 = vadd.f32 %v423, %v610
        %v612 = vpop.f32.mrb[0].mxu0
        %v613 = vadd.f32 %v423, %v612
        %614 = vmatprep.mubr.f32.mxu0 0.0
        %615 = vmatmul.mubr.f32.gmra.mrb[0].mxu0 %v441
        %v616 = vpop.f32.mrb[0].mxu0
        %v617 = vadd.f32 %v428, %v616
        %v618 = vpop.f32.mrb[0].mxu0
        %v619 = vadd.f32 %v428, %v618
        %620 = vdwg.mxu0
        %v621 = vtanh.pop %v510
        %v622 = vtanh.pop %v512
        %v623 = vtanh.pop %v599
        %v624 = vtanh.pop %v601
        %v625 = vtanh.pop %v516
        %v626 = vtanh.pop %v518
        %v627 = vtanh.pop %v605
        %v628 = vtanh.pop %v607
        %v629 = vtanh.pop %v522
        %v630 = vtanh.pop %v524
        %v631 = vtanh.pop %v611
        %v632 = vtanh.pop %v613
        %v633 = vtanh.pop %v528
        %v634 = vtanh.pop %v530
        %v635 = vtanh.pop %v617
        %v636 = vtanh.pop %v619
        %638 = vset.pattern.permute.xlu0 0
        %639 = vperm.xlu0 %638, %v295
        %v640 = vpop.permute.xlu0 %639
        %643 = vset.pattern.permute.xlu0 0
        %644 = vperm.xlu0 %643, %v296
        %v645 = vpop.permute.xlu0 %644
        %648 = vset.pattern.permute.xlu0 0
        %649 = vperm.xlu0 %648, %v297
        %v650 = vpop.permute.xlu0 %649
        %653 = vset.pattern.permute.xlu0 0
        %654 = vperm.xlu0 %653, %v298
        %v655 = vpop.permute.xlu0 %654
        %v657 = vmul.f32 %v640, %v621
        %v658 = vmul.f32 %v640, %v622
        %v659 = vmul.f32 %v640, %v623
        %v660 = vmul.f32 %v640, %v624
        %v661 = vmul.f32 %v645, %v625
        %v662 = vmul.f32 %v645, %v626
        %v663 = vmul.f32 %v645, %v627
        %v664 = vmul.f32 %v645, %v628
        %v665 = vmul.f32 %v650, %v629
        %v666 = vmul.f32 %v650, %v630
        %v667 = vmul.f32 %v650, %v631
        %v668 = vmul.f32 %v650, %v632
        %v669 = vmul.f32 %v655, %v633
        %v670 = vmul.f32 %v655, %v634
        %v671 = vmul.f32 %v655, %v635
        %v672 = vmul.f32 %v655, %v636
        %v673 = vadd.f32 %v657, %v661
        %v674 = vadd.f32 %v673, %v665
        %v675 = vadd.f32 %v674, %v669
        %v676 = vrot.slane %v675, 4
        %v677 = vadd.f32 %v675, %v676
        %v678 = vrot.slane %v677, 2
        %v679 = vadd.f32 %v677, %v678
        %v680 = vrot.slane %v679, 1
        %v681 = vadd.f32 %v679, %v680
        %v682 = vadd.f32 %v658, %v662
        %v683 = vadd.f32 %v682, %v666
        %v684 = vadd.f32 %v683, %v670
        %v685 = vrot.slane %v684, 4
        %v686 = vadd.f32 %v684, %v685
        %v687 = vrot.slane %v686, 2
        %v688 = vadd.f32 %v686, %v687
        %v689 = vrot.slane %v688, 1
        %v690 = vadd.f32 %v688, %v689
        %v691 = vadd.f32 %v659, %v663
        %v692 = vadd.f32 %v691, %v667
        %v693 = vadd.f32 %v692, %v671
        %v694 = vrot.slane %v693, 4
        %v695 = vadd.f32 %v693, %v694
        %v696 = vrot.slane %v695, 2
        %v697 = vadd.f32 %v695, %v696
        %v698 = vrot.slane %v697, 1
        %v699 = vadd.f32 %v697, %v698
        %v700 = vadd.f32 %v660, %v664
        %v701 = vadd.f32 %v700, %v668
        %v702 = vadd.f32 %v701, %v672
        %v703 = vrot.slane %v702, 4
        %v704 = vadd.f32 %v702, %v703
        %v705 = vrot.slane %v704, 2
        %v706 = vadd.f32 %v704, %v705
        %v707 = vrot.slane %v706, 1
        %v708 = vadd.f32 %v706, %v707
        %710 = vset.pattern.permute.xlu0 0
        %711 = vperm.xlu0 %710, %v299
        %v712 = vpop.permute.xlu0 %711
        %v714 = vlaneseq
        %v715 = vshrl.u32 %v714, 7
        %v716 = vsub.s32 0, %v715
        %v717 = vrot.slane %v712, %v716
        %v718 = vadd.f32 %v681, %v717
        %v719 = vadd.f32 %v690, %v717
        %v720 = vadd.f32 %v699, %v717
        %v721 = vadd.f32 %v708, %v717
        %v726 = vcombine.low %v718, %v719
        %v727 = vcombine.low %v720, %v721
        %v729 = vunpack.c.l.s4 1966171168
        %v730 = vunpack.c.0.s8 %v729
        %v731 = vlaneseq
        %v732 = vshrl.u32 %v731, 7
        %v733 = vsub.s32 %v730, %v732
        %v734 = vrot.slane %v726, %v733
        %v736 = vunpack.c.l.s4 1966171168
        %v737 = vunpack.c.0.s8 %v736
        %v738 = vlaneseq
        %v739 = vshrl.u32 %v738, 7
        %v740 = vsub.s32 %v737, %v739
        %v741 = vrot.slane %v727, %v740
        %v742 = vcombine.low %v734, %v741
        %v744 = vunpack.c.l.s4 1966171168
        %v745 = vunpack.c.0.s8 %v744
        %v746 = vlaneseq
        %v747 = vshrl.u32 %v746, 7
        %v748 = vsub.s32 %v745, %v747
        %v749 = vrot.slane %v742, %v748
        %v751 = vlaneseq
        %vm752 = vcmp.ge.s32.totalorder %v751, 0
        %vm753 = vcmp.lt.s32.totalorder %v751, 512
        %vm754 = vmand %vm752, %vm753
        %755 = vst.msk [vmem:[%s272] sm:$0xf] %vm754, %v749
        %s756 = sand.u32 %s183, 1
        %s757 = scalar_lea.sflag [#allocation4], %s756
        %s758 = sand.u32 %s183, 1
        %s759 = smul.addr %s758, 4
        %s760 = scalar_lea.vmem [#allocation3], %s759
        // Predicated region
        $region49: #{tpu_custom_call.1} parent=47 // pred_check
          %p761 = pneg %p193
        $region50: #{tpu_custom_call.1} parent=47 // pred_check_branch
          %763 = sbr.rel (%p761) target = $region52
        $region51: #{tpu_custom_call.1} parent=47 // pred_region
          %s764 = smul.u32 4, %s23
          %s766 = ssub.s32 64, 64
          %767 = vsyncadd %s757, %s766
          %s768 = smul.addr %s764, 16
          %s769 = scalar_lea.hbm %s7, %s768
          %s771 = sshll.u32 %s760, 4
          %s772 = int_to_ptr.vmem [resolvable:$true] %s771
          %774 = dma.vmem_to_hbm [thread:$0]  %s772, 64, %s769, %s757
        $region52: #{tpu_custom_call.1} parent=47 // pred_fallthru
          _
      $region48: #{tpu_custom_call.1} parent=5 // pred_fallthru
        _
      %p775 = scmp.le.s32.totalorder 2, %s18
      // Predicated region
      $region53: #{tpu_custom_call.1} parent=5 // pred_check
        %p776 = pneg %p775
      $region54: #{tpu_custom_call.1} parent=5 // pred_check_branch
        %778 = sbr.rel (%p776) target = $region56
      $region55: #{tpu_custom_call.1} parent=5 // pred_region
        %s779 = ssub.s32 %s18, 2
        // Predicated region
        $region57: #{tpu_custom_call.1} parent=55 // pred_check
          %p780 = pneg %p199
        $region58: #{tpu_custom_call.1} parent=55 // pred_check_branch
          %782 = sbr.rel (%p780) target = $region60
        $region59: #{tpu_custom_call.1} parent=55 // pred_region
          %s783 = sand.u32 %s184, 1
          %s784 = scalar_lea.sflag [#allocation4], %s783
          %s785 = sand.u32 %s184, 1
          %s786 = smul.addr %s785, 4
          %s787 = scalar_lea.vmem [#allocation3], %s786
          %788 = dma.done %s784, 64
        $region60: #{tpu_custom_call.1} parent=55 // pred_fallthru
          _
      $region56: #{tpu_custom_call.1} parent=5 // pred_fallthru
        _
    $region6: #{tpu_custom_call.1} parent=1 // loop_footer
      %s22 = sadd.s32 1, %s18
    $region7: #{tpu_custom_call.1} parent=1 // loop_footer_branch
      %17 = sbr.rel target = $region3
    $region8: #{tpu_custom_call.1} parent=1 // loop_exit
      _
    %789 = vsyncpa [#allocation4], 1
    %s790 = scalar_lea.sflag [#allocation4], 1
    %791 = vsyncpa %s790, 1

</llo_original>
